<compile_context>
chip_gen: v6e
topology: v6e:2x2x1
jax: 0.10.0
libtpu: 0.0.40
codegen_flags: <defaults>
</compile_context>

<pallas_src>
import math

import jax
import jax.numpy as jnp
import numpy as np
from jax import lax
from jax.experimental import pallas as pl
from jax.experimental.pallas import tpu as pltpu


def _cdiv(a, b):
    return -(-a // b)


def _gaussian_taps_1d(size, sigma):
    """Normalised 1D Gaussian taps (matches the module's per-axis factor)."""
    xs = np.arange(size, dtype=np.float64)
    mean = (size - 1) / 2.0
    taps = np.exp(-(((xs - mean) / sigma) ** 2) / 2.0) / (sigma * math.sqrt(2.0 * math.pi))
    return taps / taps.sum()


def _gaussian_weight_2d(channels, kernel_size, sigma, dim=2, dtype=jnp.float32):
    """Replicates GaussianSmoothing.__init__ weight construction (reference only)."""
    if isinstance(kernel_size, (int, float)):
        kernel_size = [int(kernel_size)] * dim
    if isinstance(sigma, (int, float)):
        sigma = [float(sigma)] * dim
    grids = jnp.meshgrid(
        *[jnp.arange(size, dtype=jnp.float32) for size in kernel_size], indexing="ij"
    )
    kernel = jnp.array(1.0, dtype=jnp.float32)
    for size, std, mgrid in zip(kernel_size, sigma, grids):
        mean = (size - 1) / 2.0
        kernel = kernel * (
            1.0 / (std * math.sqrt(2 * math.pi))
            * jnp.exp(-(((mgrid - mean) / std) ** 2) / 2.0)
        )
    kernel = kernel / jnp.sum(kernel)
    kernel = kernel.reshape((1, 1) + kernel.shape)
    kernel = jnp.tile(kernel, (channels,) + (1,) * (kernel.ndim - 1))
    return kernel.astype(dtype)


def _vmem_capacity_bytes():
    """Physical VMEM of the attached chip; conservative (v7x) fallback."""
    try:
        info = pltpu.get_tpu_info()
        cap = getattr(info, "vmem_capacity_bytes", None)
        if cap:
            return int(cap)
    except Exception:
        pass
    return 64 * 1024 * 1024


def _make_kernel_w_on_lanes(gy, gx, H_out, W_out):
    """Block layout (TPp, H, W): planes leading, H on sublanes, W on lanes."""
    gy = [float(v) for v in gy]
    gx = [float(v) for v in gx]
    Ky, Kx = len(gy), len(gx)

    def kernel(x_ref, o_ref):
        # Vertical (H) pass first, streaming tap slices straight from the ref
        # so no full-size f32 temporary is materialised (halves vreg footprint
        # for bf16 inputs).
        row = gy[0] * x_ref[:, 0:H_out, :].astype(jnp.float32)
        for dy in range(1, Ky):
            row = row + gy[dy] * x_ref[:, dy:dy + H_out, :].astype(jnp.float32)
        # Horizontal (W / lane axis) pass on the reduced (TPp, H_out, W) block.
        # TODO(synk): bundle-verify these lane-offset slices lower to XLU
        # rotates; if they materialise copies, switch to pltpu.roll + mask.
        acc = gx[0] * row[:, :, 0:W_out]
        for dx in range(1, Kx):
            acc = acc + gx[dx] * row[:, :, dx:dx + W_out]
        o_ref[...] = acc.astype(o_ref.dtype)

    return kernel


def _make_kernel_planes_on_lanes(gy, gx, H_out, W_out):
    """Block layout (H, W, TP): H leading, W on sublanes, planes on lanes."""
    gy = [float(v) for v in gy]
    gx = [float(v) for v in gx]
    Ky, Kx = len(gy), len(gx)

    def kernel(x_ref, o_ref):
        # Vertical (H / leading axis) pass first, streaming from the ref.
        row = gy[0] * x_ref[0:H_out, :, :].astype(jnp.float32)
        for dy in range(1, Ky):
            row = row + gy[dy] * x_ref[dy:dy + H_out, :, :].astype(jnp.float32)
        # Horizontal (W / sublane axis) pass on the reduced (H_out, W, TP) block.
        acc = gx[0] * row[:, 0:W_out, :]
        for dx in range(1, Kx):
            acc = acc + gx[dx] * row[:, dx:dx + W_out, :]
        o_ref[...] = acc.astype(o_ref.dtype)

    return kernel


def gaussian_smoothing_2d(x, kernel_size, sigma, out_dtype=None):
    """Depthwise (groups=C) valid 2D Gaussian smoothing.

    Matches F.conv2d(input, weight, groups=channels) with the module's weight
    (all channels share the same normalised Gaussian kernel).

    Args:
      x: (N, C, H, W) input.
      kernel_size: int or (Ky, Kx).
      sigma: float or (sigma_y, sigma_x).
      out_dtype: output dtype; defaults to x.dtype (kernel is HBM-bound, so a
        narrow output halves store traffic for bf16 inputs).
    Returns:
      (N, C, H - Ky + 1, W - Kx + 1) array of out_dtype.
    """
    if isinstance(kernel_size, (int, float)):
        kernel_size = (int(kernel_size),) * 2
    if isinstance(sigma, (int, float)):
        sigma = (float(sigma),) * 2
    Ky, Kx = int(kernel_size[0]), int(kernel_size[1])
    gy = _gaussian_taps_1d(Ky, float(sigma[0]))
    gx = _gaussian_taps_1d(Kx, float(sigma[1]))

    N, C, H, W = x.shape
    if H < Ky or W < Kx:
        raise ValueError(
            f"Spatial dims ({H},{W}) must be >= kernel_size ({Ky},{Kx}) for valid conv."
        )
    H_out, W_out = H - Ky + 1, W - Kx + 1
    P = N * C

    out_dtype = np.dtype(x.dtype if out_dtype is None else out_dtype)
    in_item = np.dtype(x.dtype).itemsize
    out_item = out_dtype.itemsize

    vmem_cap = _vmem_capacity_bytes()
    budget = int(0.70 * vmem_cap)            # for double-buffered (in+out) blocks
    per_plane = H * W * in_item + H_out * W_out * out_item

    x3 = x.reshape(P, H, W)                  # free reshape, no data movement

    if W >= 128:
        # -------- natural layout (P, H, W): W already lane-dense, so no
        # wrapper-side HBM transposes at all (the conv is HBM-bound).
        tpp_budget = max(1, budget // (2 * per_plane))
        target_chunks = min(P, 4)            # >=2 steps: pipelining + megacore
        TPp = max(1, min(tpp_budget, _cdiv(P, target_chunks)))
        num_chunks = _cdiv(P, TPp)
        P_pad = num_chunks * TPp
        if P_pad != P:
            x3 = jnp.pad(x3, ((0, P_pad - P), (0, 0), (0, 0)))
        block_bytes = per_plane * TPp

        kernel = _make_kernel_w_on_lanes(gy, gx, H_out, W_out)
        x_in = x3
        in_block, out_block = (TPp, H, W), (TPp, H_out, W_out)
        in_idx = lambda p: (p, 0, 0)
        out_idx = lambda p: (p, 0, 0)
        out_full = (P_pad, H_out, W_out)
    else:
        # -------- tiny-W inputs: pack planes onto lanes (H, W, P) so loads and
        # stores stay lane-dense; the two transposes are cheap at these sizes.
        x_t = jnp.transpose(x3, (1, 2, 0))   # (H, W, P)
        if P <= 128:
            TP, P_pad = P, P                 # full-extent last block dim: legal
        else:
            tp_budget = max(128, (budget // (2 * per_plane)) // 128 * 128)
            tp_cap = max(128, (_cdiv(P, 4) // 128) * 128)
            TP = min(tp_budget, tp_cap)
            P_pad = _cdiv(P, TP) * TP
            if P_pad != P:
                x_t = jnp.pad(x_t, ((0, 0), (0, 0), (0, P_pad - P)))
        num_chunks = P_pad // TP
        block_bytes = per_plane * TP

        kernel = _make_kernel_planes_on_lanes(gy, gx, H_out, W_out)
        x_in = x_t
        in_block, out_block = (H, W, TP), (H_out, W_out, TP)
        in_idx = lambda p: (0, 0, p)
        out_idx = lambda p: (0, 0, p)
        out_full = (H_out, W_out, P_pad)

    # 3-deep input buffering only for small blocks with enough grid steps to
    # hide DMA latency; default double buffering for big blocks (VMEM budget).
    use_deep = (block_bytes <= (4 << 20)) and (num_chunks >= 3)
    if use_deep:
        in_spec = pl.BlockSpec(in_block, in_idx, pipeline_mode=pl.Buffered(3))
    else:
        in_spec = pl.BlockSpec(in_block, in_idx)
    out_spec = pl.BlockSpec(out_block, out_idx)

    # VMEM request: covers double-buffered in+out blocks plus slack, capped
    # below the detected chip's physical VMEM (64 MiB v7x, 128 MiB v5e/v6e).
    vmem_limit = int(min(0.85 * vmem_cap, max(32 << 20, 4 * block_bytes)))

    out_flat = pl.pallas_call(
        kernel,
        out_shape=jax.ShapeDtypeStruct(out_full, out_dtype),
        grid_spec=pltpu.PrefetchScalarGridSpec(
            num_scalar_prefetch=0,
            grid=(num_chunks,),
            in_specs=[in_spec],
            out_specs=out_spec,
        ),
        compiler_params=pltpu.CompilerParams(
            dimension_semantics=("parallel",),
            vmem_limit_bytes=vmem_limit,
        ),
    )(x_in)

    if W >= 128:
        out3 = out_flat[:P] if P_pad != P else out_flat
        return out3.reshape(N, C, H_out, W_out)
    out_t = out_flat[:, :, :P] if P_pad != P else out_flat
    return jnp.transpose(out_t, (2, 0, 1)).reshape(N, C, H_out, W_out)


def _reference(x, weight, channels):
    """Plain-JAX reference: F.conv2d(input, weight, groups=channels)."""
    return lax.conv_general_dilated(
        x.astype(jnp.float32),
        weight.astype(jnp.float32),
        window_strides=(1, 1),
        padding="VALID",
        dimension_numbers=("NCHW", "OIHW", "NCHW"),
        feature_group_count=channels,
    )


def _check(x, channels, kernel_size, sigma):
    out = jax.block_until_ready(gaussian_smoothing_2d(x, kernel_size, sigma))
    weight = _gaussian_weight_2d(channels, kernel_size, sigma, dim=2)
    ref = _reference(x, weight, channels)
    assert out.shape == ref.shape, (out.shape, ref.shape)
    assert jnp.allclose(out.astype(jnp.float32), ref, atol=1e-4, rtol=1e-4), "mismatch"


if __name__ == "__main__":
    kernel_size = 3
    sigma = 1.0
    key = jax.random.PRNGKey(0)
    k_a, k_b, k_c = jax.random.split(key, 3)

    # (a) GaussianSmoothing(channels=4, kernel_size=3, sigma=1.0) demo shape:
    #     tiny W -> lane-packed planes, single grid step.
    x_a = jax.random.normal(k_a, (2, 4, 16, 16), dtype=jnp.float32)
    _check(x_a, 4, kernel_size, sigma)

    # (b) W >= 128 -> natural (P, H, W) layout, no wrapper HBM transposes.
    x_b = jax.random.normal(k_b, (1, 2, 12, 128), dtype=jnp.float32)
    _check(x_b, 2, kernel_size, sigma)

    # (c) many small planes -> lane-packed chunks of 128 planes, 3 grid steps,
    #     3-deep input buffering.
    x_c = jax.random.normal(k_c, (3, 128, 16, 16), dtype=jnp.float32)
    _check(x_c, 128, kernel_size, sigma)

    print("KERNEL_OK")
</pallas_src>

<mosaic_0001>
module attributes {stable_mosaic.version = 11 : i64} {
  func.func @kernel(%arg0: i32, %arg1: memref<16x16x8xf32, #tpu.memory_space<vmem>>, %arg2: memref<14x14x8xf32, #tpu.memory_space<vmem>>) attributes {dimension_semantics = [#tpu.dimension_semantics<parallel>], iteration_bounds = array<i64: 1>, scalar_prefetch = 0 : i64, scratch_operands = 0 : i64, tpu.core_type = #tpu.core_type<tc>, window_params = [{transform_indices = @transform_0, window_bounds = array<i64: 16, 16, 8>}, {transform_indices = @transform_1, window_bounds = array<i64: 14, 14, 8>}]} {
    %c0 = arith.constant 0 : index
    %c0_0 = arith.constant 0 : index
    %c0_1 = arith.constant 0 : index
    %0 = vector.load %arg1[%c0, %c0_0, %c0_1] : memref<16x16x8xf32, #tpu.memory_space<vmem>>, vector<14x16x8xf32>
    %cst = arith.constant 0.274068624 : f32
    %1 = vector.broadcast %cst : f32 to vector<14x16x8xf32>
    %2 = arith.mulf %1, %0 : vector<14x16x8xf32>
    %c1 = arith.constant 1 : index
    %c0_2 = arith.constant 0 : index
    %c0_3 = arith.constant 0 : index
    %3 = vector.load %arg1[%c1, %c0_2, %c0_3] : memref<16x16x8xf32, #tpu.memory_space<vmem>>, vector<14x16x8xf32>
    %cst_4 = arith.constant 0.451862752 : f32
    %4 = vector.broadcast %cst_4 : f32 to vector<14x16x8xf32>
    %5 = arith.mulf %4, %3 : vector<14x16x8xf32>
    %6 = arith.addf %2, %5 : vector<14x16x8xf32>
    %c2 = arith.constant 2 : index
    %c0_5 = arith.constant 0 : index
    %c0_6 = arith.constant 0 : index
    %7 = vector.load %arg1[%c2, %c0_5, %c0_6] : memref<16x16x8xf32, #tpu.memory_space<vmem>>, vector<14x16x8xf32>
    %cst_7 = arith.constant 0.274068624 : f32
    %8 = vector.broadcast %cst_7 : f32 to vector<14x16x8xf32>
    %9 = arith.mulf %8, %7 : vector<14x16x8xf32>
    %10 = arith.addf %6, %9 : vector<14x16x8xf32>
    %11 = vector.extract_strided_slice %10 {offsets = [0, 0, 0], sizes = [14, 14, 8], strides = [1, 1, 1]} : vector<14x16x8xf32> to vector<14x14x8xf32>
    %cst_8 = arith.constant 0.274068624 : f32
    %12 = vector.broadcast %cst_8 : f32 to vector<14x14x8xf32>
    %13 = arith.mulf %12, %11 : vector<14x14x8xf32>
    %14 = vector.extract_strided_slice %10 {offsets = [0, 1, 0], sizes = [14, 14, 8], strides = [1, 1, 1]} : vector<14x16x8xf32> to vector<14x14x8xf32>
    %cst_9 = arith.constant 0.451862752 : f32
    %15 = vector.broadcast %cst_9 : f32 to vector<14x14x8xf32>
    %16 = arith.mulf %15, %14 : vector<14x14x8xf32>
    %17 = arith.addf %13, %16 : vector<14x14x8xf32>
    %18 = vector.extract_strided_slice %10 {offsets = [0, 2, 0], sizes = [14, 14, 8], strides = [1, 1, 1]} : vector<14x16x8xf32> to vector<14x14x8xf32>
    %cst_10 = arith.constant 0.274068624 : f32
    %19 = vector.broadcast %cst_10 : f32 to vector<14x14x8xf32>
    %20 = arith.mulf %19, %18 : vector<14x14x8xf32>
    %21 = arith.addf %17, %20 : vector<14x14x8xf32>
    %c0_11 = arith.constant 0 : index
    %c0_12 = arith.constant 0 : index
    %c0_13 = arith.constant 0 : index
    %22 = vector.load %arg2[%c0_11, %c0_12, %c0_13] : memref<14x14x8xf32, #tpu.memory_space<vmem>>, vector<14x14x8xf32>
    tpu.vector_store %arg2[%c0_11, %c0_12, %c0_13], %21 {strides = array<i32>} : memref<14x14x8xf32, #tpu.memory_space<vmem>>, vector<14x14x8xf32>,
    return
  }
  func.func @transform_0(%arg0: i32) -> (i32, i32, i32) {
    %c0_i32 = arith.constant 0 : i32
    %c0_i32_0 = arith.constant 0 : i32
    %c0_i32_1 = arith.constant 0 : i32
    return %c0_i32, %c0_i32_0, %arg0 : i32, i32, i32
  }
  func.func @transform_1(%arg0: i32) -> (i32, i32, i32) {
    %c0_i32 = arith.constant 0 : i32
    %c0_i32_0 = arith.constant 0 : i32
    %c0_i32_1 = arith.constant 0 : i32
    return %c0_i32, %c0_i32_0, %arg0 : i32, i32, i32
  }
}

</mosaic_0001>

<llo_original>
// kernel: tpu_custom_call.1
$region0: #{tpu_custom_call.1}
  #allocation0 [shape = 'u32[]', space=smem, size = 0x4, offset = 0x4, fixed_abs, tag = 'smem constant byte address 0x4 - core index']
  #allocation1 [shape = 'u32[144,128]{1,0:T(1,128)}', space=vmem, size = 0x12000, scoped, tag = 'internal scratch']
  %s0 = inlined_call_operand.vmem [shape: f32[16,16,8], index: 0, kind: input, shape index: {}]
  %s1 = inlined_call_operand.vmem [shape: f32[14,14,8], index: 1, kind: output, shape index: {}]
  %s2 = sld [smem:[#allocation0]]
  $region14: #{tpu_custom_call.1} parent=0
    _
  %s4 = ssub.s32 1, %s2
  %s5 = scalar_select 0, %s4, %s2
  // Predicated region
  $region2: #{tpu_custom_call.1} parent=0 // pred_check
    _
  $region3: #{tpu_custom_call.1} parent=0 // pred_check_branch
    %7 = sbr.rel (0) target = $region5
  $region4: #{tpu_custom_call.1} parent=0 // pred_region
    _
  $region5: #{tpu_custom_call.1} parent=0 // pred_fallthru
    _
  %v8 = vld [vmem:[%s0] sm:$0xff]
  %v9 = vld [vmem:[%s0 + $0x8] sm:$0xff]
  %v10 = vld [vmem:[%s0 + $0x10] sm:$0xff]
  %v11 = vld [vmem:[%s0 + $0x18] sm:$0xff]
  %v12 = vld [vmem:[%s0 + $0x20] sm:$0xff]
  %v13 = vld [vmem:[%s0 + $0x28] sm:$0xff]
  %v14 = vld [vmem:[%s0 + $0x30] sm:$0xff]
  %v15 = vld [vmem:[%s0 + $0x38] sm:$0xff]
  %v16 = vld [vmem:[%s0 + $0x40] sm:$0xff]
  %v17 = vld [vmem:[%s0 + $0x48] sm:$0xff]
  %v18 = vld [vmem:[%s0 + $0x50] sm:$0xff]
  %v19 = vld [vmem:[%s0 + $0x58] sm:$0xff]
  %v20 = vld [vmem:[%s0 + $0x60] sm:$0xff]
  %v21 = vld [vmem:[%s0 + $0x68] sm:$0xff]
  %v22 = vld [vmem:[%s0 + $0x70] sm:$0xff]
  %v23 = vld [vmem:[%s0 + $0x78] sm:$0xff]
  %v24 = vld [vmem:[%s0 + $0x80] sm:$0xff]
  %v25 = vld [vmem:[%s0 + $0x88] sm:$0xff]
  %v26 = vld [vmem:[%s0 + $0x90] sm:$0xff]
  %v27 = vld [vmem:[%s0 + $0x98] sm:$0xff]
  %v28 = vld [vmem:[%s0 + $0xa0] sm:$0xff]
  %v29 = vld [vmem:[%s0 + $0xa8] sm:$0xff]
  %v30 = vld [vmem:[%s0 + $0xb0] sm:$0xff]
  %v31 = vld [vmem:[%s0 + $0xb8] sm:$0xff]
  %v32 = vld [vmem:[%s0 + $0xc0] sm:$0xff]
  %v33 = vld [vmem:[%s0 + $0xc8] sm:$0xff]
  %v34 = vld [vmem:[%s0 + $0xd0] sm:$0xff]
  %v35 = vld [vmem:[%s0 + $0xd8] sm:$0xff]
  %v36 = vmul.f32 %v8, 0.27406862
  %v37 = vmul.f32 %v9, 0.27406862
  %v38 = vmul.f32 %v10, 0.27406862
  %v39 = vmul.f32 %v11, 0.27406862
  %v40 = vmul.f32 %v12, 0.27406862
  %v41 = vmul.f32 %v13, 0.27406862
  %v42 = vmul.f32 %v14, 0.27406862
  %v43 = vmul.f32 %v15, 0.27406862
  %v44 = vmul.f32 %v16, 0.27406862
  %v45 = vmul.f32 %v17, 0.27406862
  %v46 = vmul.f32 %v18, 0.27406862
  %v47 = vmul.f32 %v19, 0.27406862
  %v48 = vmul.f32 %v20, 0.27406862
  %v49 = vmul.f32 %v21, 0.27406862
  %v50 = vmul.f32 %v22, 0.27406862
  %v51 = vmul.f32 %v23, 0.27406862
  %v52 = vmul.f32 %v24, 0.27406862
  %v53 = vmul.f32 %v25, 0.27406862
  %v54 = vmul.f32 %v26, 0.27406862
  %v55 = vmul.f32 %v27, 0.27406862
  %v56 = vmul.f32 %v28, 0.27406862
  %v57 = vmul.f32 %v29, 0.27406862
  %v58 = vmul.f32 %v30, 0.27406862
  %v59 = vmul.f32 %v31, 0.27406862
  %v60 = vmul.f32 %v32, 0.27406862
  %v61 = vmul.f32 %v33, 0.27406862
  %v62 = vmul.f32 %v34, 0.27406862
  %v63 = vmul.f32 %v35, 0.27406862
  %s64 = scalar_lea.vmem %s0, 16
  %v65 = vld [vmem:[%s64] sm:$0xff]
  %v66 = vld [vmem:[%s64 + $0x8] sm:$0xff]
  %v67 = vld [vmem:[%s64 + $0x10] sm:$0xff]
  %v68 = vld [vmem:[%s64 + $0x18] sm:$0xff]
  %v69 = vld [vmem:[%s64 + $0x20] sm:$0xff]
  %v70 = vld [vmem:[%s64 + $0x28] sm:$0xff]
  %v71 = vld [vmem:[%s64 + $0x30] sm:$0xff]
  %v72 = vld [vmem:[%s64 + $0x38] sm:$0xff]
  %v73 = vld [vmem:[%s64 + $0x40] sm:$0xff]
  %v74 = vld [vmem:[%s64 + $0x48] sm:$0xff]
  %v75 = vld [vmem:[%s64 + $0x50] sm:$0xff]
  %v76 = vld [vmem:[%s64 + $0x58] sm:$0xff]
  %v77 = vld [vmem:[%s64 + $0x60] sm:$0xff]
  %v78 = vld [vmem:[%s64 + $0x68] sm:$0xff]
  %v79 = vld [vmem:[%s64 + $0x70] sm:$0xff]
  %v80 = vld [vmem:[%s64 + $0x78] sm:$0xff]
  %v81 = vld [vmem:[%s64 + $0x80] sm:$0xff]
  %v82 = vld [vmem:[%s64 + $0x88] sm:$0xff]
  %v83 = vld [vmem:[%s64 + $0x90] sm:$0xff]
  %v84 = vld [vmem:[%s64 + $0x98] sm:$0xff]
  %v85 = vld [vmem:[%s64 + $0xa0] sm:$0xff]
  %v86 = vld [vmem:[%s64 + $0xa8] sm:$0xff]
  %v87 = vld [vmem:[%s64 + $0xb0] sm:$0xff]
  %v88 = vld [vmem:[%s64 + $0xb8] sm:$0xff]
  %v89 = vld [vmem:[%s64 + $0xc0] sm:$0xff]
  %v90 = vld [vmem:[%s64 + $0xc8] sm:$0xff]
  %v91 = vld [vmem:[%s64 + $0xd0] sm:$0xff]
  %v92 = vld [vmem:[%s64 + $0xd8] sm:$0xff]
  %v93 = vmul.f32 %v65, 0.45186275
  %v94 = vmul.f32 %v66, 0.45186275
  %v95 = vmul.f32 %v67, 0.45186275
  %v96 = vmul.f32 %v68, 0.45186275
  %v97 = vmul.f32 %v69, 0.45186275
  %v98 = vmul.f32 %v70, 0.45186275
  %v99 = vmul.f32 %v71, 0.45186275
  %v100 = vmul.f32 %v72, 0.45186275
  %v101 = vmul.f32 %v73, 0.45186275
  %v102 = vmul.f32 %v74, 0.45186275
  %v103 = vmul.f32 %v75, 0.45186275
  %v104 = vmul.f32 %v76, 0.45186275
  %v105 = vmul.f32 %v77, 0.45186275
  %v106 = vmul.f32 %v78, 0.45186275
  %v107 = vmul.f32 %v79, 0.45186275
  %v108 = vmul.f32 %v80, 0.45186275
  %v109 = vmul.f32 %v81, 0.45186275
  %v110 = vmul.f32 %v82, 0.45186275
  %v111 = vmul.f32 %v83, 0.45186275
  %v112 = vmul.f32 %v84, 0.45186275
  %v113 = vmul.f32 %v85, 0.45186275
  %v114 = vmul.f32 %v86, 0.45186275
  %v115 = vmul.f32 %v87, 0.45186275
  %v116 = vmul.f32 %v88, 0.45186275
  %v117 = vmul.f32 %v89, 0.45186275
  %v118 = vmul.f32 %v90, 0.45186275
  %v119 = vmul.f32 %v91, 0.45186275
  %v120 = vmul.f32 %v92, 0.45186275
  %v121 = vadd.f32 %v36, %v93
  %v122 = vadd.f32 %v37, %v94
  %v123 = vadd.f32 %v38, %v95
  %v124 = vadd.f32 %v39, %v96
  %v125 = vadd.f32 %v40, %v97
  %v126 = vadd.f32 %v41, %v98
  %v127 = vadd.f32 %v42, %v99
  %v128 = vadd.f32 %v43, %v100
  %v129 = vadd.f32 %v44, %v101
  %v130 = vadd.f32 %v45, %v102
  %v131 = vadd.f32 %v46, %v103
  %v132 = vadd.f32 %v47, %v104
  %v133 = vadd.f32 %v48, %v105
  %v134 = vadd.f32 %v49, %v106
  %v135 = vadd.f32 %v50, %v107
  %v136 = vadd.f32 %v51, %v108
  %v137 = vadd.f32 %v52, %v109
  %v138 = vadd.f32 %v53, %v110
  %v139 = vadd.f32 %v54, %v111
  %v140 = vadd.f32 %v55, %v112
  %v141 = vadd.f32 %v56, %v113
  %v142 = vadd.f32 %v57, %v114
  %v143 = vadd.f32 %v58, %v115
  %v144 = vadd.f32 %v59, %v116
  %v145 = vadd.f32 %v60, %v117
  %v146 = vadd.f32 %v61, %v118
  %v147 = vadd.f32 %v62, %v119
  %v148 = vadd.f32 %v63, %v120
  %s149 = scalar_lea.vmem %s0, 32
  %v150 = vld [vmem:[%s149] sm:$0xff]
  %v151 = vld [vmem:[%s149 + $0x8] sm:$0xff]
  %v152 = vld [vmem:[%s149 + $0x10] sm:$0xff]
  %v153 = vld [vmem:[%s149 + $0x18] sm:$0xff]
  %v154 = vld [vmem:[%s149 + $0x20] sm:$0xff]
  %v155 = vld [vmem:[%s149 + $0x28] sm:$0xff]
  %v156 = vld [vmem:[%s149 + $0x30] sm:$0xff]
  %v157 = vld [vmem:[%s149 + $0x38] sm:$0xff]
  %v158 = vld [vmem:[%s149 + $0x40] sm:$0xff]
  %v159 = vld [vmem:[%s149 + $0x48] sm:$0xff]
  %v160 = vld [vmem:[%s149 + $0x50] sm:$0xff]
  %v161 = vld [vmem:[%s149 + $0x58] sm:$0xff]
  %v162 = vld [vmem:[%s149 + $0x60] sm:$0xff]
  %v163 = vld [vmem:[%s149 + $0x68] sm:$0xff]
  %v164 = vld [vmem:[%s149 + $0x70] sm:$0xff]
  %v165 = vld [vmem:[%s149 + $0x78] sm:$0xff]
  %v166 = vld [vmem:[%s149 + $0x80] sm:$0xff]
  %v167 = vld [vmem:[%s149 + $0x88] sm:$0xff]
  %v168 = vld [vmem:[%s149 + $0x90] sm:$0xff]
  %v169 = vld [vmem:[%s149 + $0x98] sm:$0xff]
  %v170 = vld [vmem:[%s149 + $0xa0] sm:$0xff]
  %v171 = vld [vmem:[%s149 + $0xa8] sm:$0xff]
  %v172 = vld [vmem:[%s149 + $0xb0] sm:$0xff]
  %v173 = vld [vmem:[%s149 + $0xb8] sm:$0xff]
  %v174 = vld [vmem:[%s149 + $0xc0] sm:$0xff]
  %v175 = vld [vmem:[%s149 + $0xc8] sm:$0xff]
  %v176 = vld [vmem:[%s149 + $0xd0] sm:$0xff]
  %v177 = vld [vmem:[%s149 + $0xd8] sm:$0xff]
  %v178 = vmul.f32 %v150, 0.27406862
  %v179 = vmul.f32 %v151, 0.27406862
  %v180 = vmul.f32 %v152, 0.27406862
  %v181 = vmul.f32 %v153, 0.27406862
  %v182 = vmul.f32 %v154, 0.27406862
  %v183 = vmul.f32 %v155, 0.27406862
  %v184 = vmul.f32 %v156, 0.27406862
  %v185 = vmul.f32 %v157, 0.27406862
  %v186 = vmul.f32 %v158, 0.27406862
  %v187 = vmul.f32 %v159, 0.27406862
  %v188 = vmul.f32 %v160, 0.27406862
  %v189 = vmul.f32 %v161, 0.27406862
  %v190 = vmul.f32 %v162, 0.27406862
  %v191 = vmul.f32 %v163, 0.27406862
  %v192 = vmul.f32 %v164, 0.27406862
  %v193 = vmul.f32 %v165, 0.27406862
  %v194 = vmul.f32 %v166, 0.27406862
  %v195 = vmul.f32 %v167, 0.27406862
  %v196 = vmul.f32 %v168, 0.27406862
  %v197 = vmul.f32 %v169, 0.27406862
  %v198 = vmul.f32 %v170, 0.27406862
  %v199 = vmul.f32 %v171, 0.27406862
  %v200 = vmul.f32 %v172, 0.27406862
  %v201 = vmul.f32 %v173, 0.27406862
  %v202 = vmul.f32 %v174, 0.27406862
  %v203 = vmul.f32 %v175, 0.27406862
  %v204 = vmul.f32 %v176, 0.27406862
  %v205 = vmul.f32 %v177, 0.27406862
  %v206 = vadd.f32 %v121, %v178
  %v207 = vadd.f32 %v122, %v179
  %v208 = vadd.f32 %v123, %v180
  %v209 = vadd.f32 %v124, %v181
  %v210 = vadd.f32 %v125, %v182
  %v211 = vadd.f32 %v126, %v183
  %v212 = vadd.f32 %v127, %v184
  %v213 = vadd.f32 %v128, %v185
  %v214 = vadd.f32 %v129, %v186
  %v215 = vadd.f32 %v130, %v187
  %v216 = vadd.f32 %v131, %v188
  %v217 = vadd.f32 %v132, %v189
  %v218 = vadd.f32 %v133, %v190
  %v219 = vadd.f32 %v134, %v191
  %v220 = vadd.f32 %v135, %v192
  %v221 = vadd.f32 %v136, %v193
  %v222 = vadd.f32 %v137, %v194
  %v223 = vadd.f32 %v138, %v195
  %v224 = vadd.f32 %v139, %v196
  %v225 = vadd.f32 %v140, %v197
  %v226 = vadd.f32 %v141, %v198
  %v227 = vadd.f32 %v142, %v199
  %v228 = vadd.f32 %v143, %v200
  %v229 = vadd.f32 %v144, %v201
  %v230 = vadd.f32 %v145, %v202
  %v231 = vadd.f32 %v146, %v203
  %v232 = vadd.f32 %v147, %v204
  %v233 = vadd.f32 %v148, %v205
  %v234 = vmul.f32 %v206, 0.27406862
  %v235 = vmul.f32 %v207, 0.27406862
  %v236 = vmul.f32 %v208, 0.27406862
  %v237 = vmul.f32 %v209, 0.27406862
  %v238 = vmul.f32 %v210, 0.27406862
  %v239 = vmul.f32 %v211, 0.27406862
  %v240 = vmul.f32 %v212, 0.27406862
  %v241 = vmul.f32 %v213, 0.27406862
  %v242 = vmul.f32 %v214, 0.27406862
  %v243 = vmul.f32 %v215, 0.27406862
  %v244 = vmul.f32 %v216, 0.27406862
  %v245 = vmul.f32 %v217, 0.27406862
  %v246 = vmul.f32 %v218, 0.27406862
  %v247 = vmul.f32 %v219, 0.27406862
  %v248 = vmul.f32 %v220, 0.27406862
  %v249 = vmul.f32 %v221, 0.27406862
  %v250 = vmul.f32 %v222, 0.27406862
  %v251 = vmul.f32 %v223, 0.27406862
  %v252 = vmul.f32 %v224, 0.27406862
  %v253 = vmul.f32 %v225, 0.27406862
  %v254 = vmul.f32 %v226, 0.27406862
  %v255 = vmul.f32 %v227, 0.27406862
  %v256 = vmul.f32 %v228, 0.27406862
  %v257 = vmul.f32 %v229, 0.27406862
  %v258 = vmul.f32 %v230, 0.27406862
  %v259 = vmul.f32 %v231, 0.27406862
  %v260 = vmul.f32 %v232, 0.27406862
  %v261 = vmul.f32 %v233, 0.27406862
  %v262 = vmul.f32 %v206, 0.45186275
  %v263 = vmul.f32 %v207, 0.45186275
  %v264 = vmul.f32 %v208, 0.45186275
  %v265 = vmul.f32 %v209, 0.45186275
  %v266 = vmul.f32 %v210, 0.45186275
  %v267 = vmul.f32 %v211, 0.45186275
  %v268 = vmul.f32 %v212, 0.45186275
  %v269 = vmul.f32 %v213, 0.45186275
  %v270 = vmul.f32 %v214, 0.45186275
  %v271 = vmul.f32 %v215, 0.45186275
  %v272 = vmul.f32 %v216, 0.45186275
  %v273 = vmul.f32 %v217, 0.45186275
  %v274 = vmul.f32 %v218, 0.45186275
  %v275 = vmul.f32 %v219, 0.45186275
  %v276 = vmul.f32 %v220, 0.45186275
  %v277 = vmul.f32 %v221, 0.45186275
  %v278 = vmul.f32 %v222, 0.45186275
  %v279 = vmul.f32 %v223, 0.45186275
  %v280 = vmul.f32 %v224, 0.45186275
  %v281 = vmul.f32 %v225, 0.45186275
  %v282 = vmul.f32 %v226, 0.45186275
  %v283 = vmul.f32 %v227, 0.45186275
  %v284 = vmul.f32 %v228, 0.45186275
  %v285 = vmul.f32 %v229, 0.45186275
  %v286 = vmul.f32 %v230, 0.45186275
  %v287 = vmul.f32 %v231, 0.45186275
  %v288 = vmul.f32 %v232, 0.45186275
  %v289 = vmul.f32 %v233, 0.45186275
  %vm318 = vcmask 1046528
  %v319 = vrot.slane %v262, 1
  %v320 = vrot.slane %v263, 1
  %v321 = vsel %vm318, %v319, %v320
  %v322 = vrot.slane %v264, 1
  %v323 = vrot.slane %v265, 1
  %v324 = vsel %vm318, %v322, %v323
  %v325 = vrot.slane %v266, 1
  %v326 = vrot.slane %v267, 1
  %v327 = vsel %vm318, %v325, %v326
  %v328 = vrot.slane %v268, 1
  %v329 = vrot.slane %v269, 1
  %v330 = vsel %vm318, %v328, %v329
  %v331 = vrot.slane %v270, 1
  %v332 = vrot.slane %v271, 1
  %v333 = vsel %vm318, %v331, %v332
  %v334 = vrot.slane %v272, 1
  %v335 = vrot.slane %v273, 1
  %v336 = vsel %vm318, %v334, %v335
  %v337 = vrot.slane %v274, 1
  %v338 = vrot.slane %v275, 1
  %v339 = vsel %vm318, %v337, %v338
  %v340 = vrot.slane %v276, 1
  %v341 = vrot.slane %v277, 1
  %v342 = vsel %vm318, %v340, %v341
  %v343 = vrot.slane %v278, 1
  %v344 = vrot.slane %v279, 1
  %v345 = vsel %vm318, %v343, %v344
  %v346 = vrot.slane %v280, 1
  %v347 = vrot.slane %v281, 1
  %v348 = vsel %vm318, %v346, %v347
  %v349 = vrot.slane %v282, 1
  %v350 = vrot.slane %v283, 1
  %v351 = vsel %vm318, %v349, %v350
  %v352 = vrot.slane %v284, 1
  %v353 = vrot.slane %v285, 1
  %v354 = vsel %vm318, %v352, %v353
  %v355 = vrot.slane %v286, 1
  %v356 = vrot.slane %v287, 1
  %v357 = vsel %vm318, %v355, %v356
  %v358 = vrot.slane %v288, 1
  %v359 = vrot.slane %v289, 1
  %v360 = vsel %vm318, %v358, %v359
  %v389 = vadd.f32 %v234, %v321
  %v390 = vadd.f32 %v235, %v320
  %v391 = vadd.f32 %v236, %v324
  %v392 = vadd.f32 %v237, %v323
  %v393 = vadd.f32 %v238, %v327
  %v394 = vadd.f32 %v239, %v326
  %v395 = vadd.f32 %v240, %v330
  %v396 = vadd.f32 %v241, %v329
  %v397 = vadd.f32 %v242, %v333
  %v398 = vadd.f32 %v243, %v332
  %v399 = vadd.f32 %v244, %v336
  %v400 = vadd.f32 %v245, %v335
  %v401 = vadd.f32 %v246, %v339
  %v402 = vadd.f32 %v247, %v338
  %v403 = vadd.f32 %v248, %v342
  %v404 = vadd.f32 %v249, %v341
  %v405 = vadd.f32 %v250, %v345
  %v406 = vadd.f32 %v251, %v344
  %v407 = vadd.f32 %v252, %v348
  %v408 = vadd.f32 %v253, %v347
  %v409 = vadd.f32 %v254, %v351
  %v410 = vadd.f32 %v255, %v350
  %v411 = vadd.f32 %v256, %v354
  %v412 = vadd.f32 %v257, %v353
  %v413 = vadd.f32 %v258, %v357
  %v414 = vadd.f32 %v259, %v356
  %v415 = vadd.f32 %v260, %v360
  %v416 = vadd.f32 %v261, %v359
  %vm445 = vcmask 1045504
  %v446 = vrot.slane %v234, 2
  %v447 = vrot.slane %v235, 2
  %v448 = vsel %vm445, %v446, %v447
  %v449 = vrot.slane %v236, 2
  %v450 = vrot.slane %v237, 2
  %v451 = vsel %vm445, %v449, %v450
  %v452 = vrot.slane %v238, 2
  %v453 = vrot.slane %v239, 2
  %v454 = vsel %vm445, %v452, %v453
  %v455 = vrot.slane %v240, 2
  %v456 = vrot.slane %v241, 2
  %v457 = vsel %vm445, %v455, %v456
  %v458 = vrot.slane %v242, 2
  %v459 = vrot.slane %v243, 2
  %v460 = vsel %vm445, %v458, %v459
  %v461 = vrot.slane %v244, 2
  %v462 = vrot.slane %v245, 2
  %v463 = vsel %vm445, %v461, %v462
  %v464 = vrot.slane %v246, 2
  %v465 = vrot.slane %v247, 2
  %v466 = vsel %vm445, %v464, %v465
  %v467 = vrot.slane %v248, 2
  %v468 = vrot.slane %v249, 2
  %v469 = vsel %vm445, %v467, %v468
  %v470 = vrot.slane %v250, 2
  %v471 = vrot.slane %v251, 2
  %v472 = vsel %vm445, %v470, %v471
  %v473 = vrot.slane %v252, 2
  %v474 = vrot.slane %v253, 2
  %v475 = vsel %vm445, %v473, %v474
  %v476 = vrot.slane %v254, 2
  %v477 = vrot.slane %v255, 2
  %v478 = vsel %vm445, %v476, %v477
  %v479 = vrot.slane %v256, 2
  %v480 = vrot.slane %v257, 2
  %v481 = vsel %vm445, %v479, %v480
  %v482 = vrot.slane %v258, 2
  %v483 = vrot.slane %v259, 2
  %v484 = vsel %vm445, %v482, %v483
  %v485 = vrot.slane %v260, 2
  %v486 = vrot.slane %v261, 2
  %v487 = vsel %vm445, %v485, %v486
  %v516 = vadd.f32 %v389, %v448
  %v517 = vadd.f32 %v390, %v447
  %v518 = vadd.f32 %v391, %v451
  %v519 = vadd.f32 %v392, %v450
  %v520 = vadd.f32 %v393, %v454
  %v521 = vadd.f32 %v394, %v453
  %v522 = vadd.f32 %v395, %v457
  %v523 = vadd.f32 %v396, %v456
  %v524 = vadd.f32 %v397, %v460
  %v525 = vadd.f32 %v398, %v459
  %v526 = vadd.f32 %v399, %v463
  %v527 = vadd.f32 %v400, %v462
  %v528 = vadd.f32 %v401, %v466
  %v529 = vadd.f32 %v402, %v465
  %v530 = vadd.f32 %v403, %v469
  %v531 = vadd.f32 %v404, %v468
  %v532 = vadd.f32 %v405, %v472
  %v533 = vadd.f32 %v406, %v471
  %v534 = vadd.f32 %v407, %v475
  %v535 = vadd.f32 %v408, %v474
  %v536 = vadd.f32 %v409, %v478
  %v537 = vadd.f32 %v410, %v477
  %v538 = vadd.f32 %v411, %v481
  %v539 = vadd.f32 %v412, %v480
  %v540 = vadd.f32 %v413, %v484
  %v541 = vadd.f32 %v414, %v483
  %v542 = vadd.f32 %v415, %v487
  %v543 = vadd.f32 %v416, %v486
  %vm544 = vcmask 64512
  %545 = vst.msk [vmem:[%s1] sm:$0xff] %vm544, %v516
  %vm546 = vcmask 62464
  %547 = vst.msk [vmem:[%s1 + $0x8] sm:$0x3f] %vm546, %v517
  %548 = vst.msk [vmem:[%s1 + $0x10] sm:$0xff] %vm544, %v518
  %549 = vst.msk [vmem:[%s1 + $0x18] sm:$0x3f] %vm546, %v519
  %550 = vst.msk [vmem:[%s1 + $0x20] sm:$0xff] %vm544, %v520
  %551 = vst.msk [vmem:[%s1 + $0x28] sm:$0x3f] %vm546, %v521
  %552 = vst.msk [vmem:[%s1 + $0x30] sm:$0xff] %vm544, %v522
  %553 = vst.msk [vmem:[%s1 + $0x38] sm:$0x3f] %vm546, %v523
  %554 = vst.msk [vmem:[%s1 + $0x40] sm:$0xff] %vm544, %v524
  %555 = vst.msk [vmem:[%s1 + $0x48] sm:$0x3f] %vm546, %v525
  %556 = vst.msk [vmem:[%s1 + $0x50] sm:$0xff] %vm544, %v526
  %557 = vst.msk [vmem:[%s1 + $0x58] sm:$0x3f] %vm546, %v527
  %558 = vst.msk [vmem:[%s1 + $0x60] sm:$0xff] %vm544, %v528
  %559 = vst.msk [vmem:[%s1 + $0x68] sm:$0x3f] %vm546, %v529
  %560 = vst.msk [vmem:[%s1 + $0x70] sm:$0xff] %vm544, %v530
  %561 = vst.msk [vmem:[%s1 + $0x78] sm:$0x3f] %vm546, %v531
  %562 = vst.msk [vmem:[%s1 + $0x80] sm:$0xff] %vm544, %v532
  %563 = vst.msk [vmem:[%s1 + $0x88] sm:$0x3f] %vm546, %v533
  %564 = vst.msk [vmem:[%s1 + $0x90] sm:$0xff] %vm544, %v534
  %565 = vst.msk [vmem:[%s1 + $0x98] sm:$0x3f] %vm546, %v535
  %566 = vst.msk [vmem:[%s1 + $0xa0] sm:$0xff] %vm544, %v536
  %567 = vst.msk [vmem:[%s1 + $0xa8] sm:$0x3f] %vm546, %v537
  %568 = vst.msk [vmem:[%s1 + $0xb0] sm:$0xff] %vm544, %v538
  %569 = vst.msk [vmem:[%s1 + $0xb8] sm:$0x3f] %vm546, %v539
  %570 = vst.msk [vmem:[%s1 + $0xc0] sm:$0xff] %vm544, %v540
  %571 = vst.msk [vmem:[%s1 + $0xc8] sm:$0x3f] %vm546, %v541
  %572 = vst.msk [vmem:[%s1 + $0xd0] sm:$0xff] %vm544, %v542
  %573 = vst.msk [vmem:[%s1 + $0xd8] sm:$0x3f] %vm546, %v543
  // Predicated region
  $region6: #{tpu_custom_call.1} parent=0 // pred_check
    _
  $region7: #{tpu_custom_call.1} parent=0 // pred_check_branch
    %575 = sbr.rel (0) target = $region9
  $region8: #{tpu_custom_call.1} parent=0 // pred_region
    _
  $region9: #{tpu_custom_call.1} parent=0 // pred_fallthru
    _
  // Predicated region
  $region10: #{tpu_custom_call.1} parent=0 // pred_check
    _
  $region11: #{tpu_custom_call.1} parent=0 // pred_check_branch
    %577 = sbr.rel (0) target = $region13
  $region12: #{tpu_custom_call.1} parent=0 // pred_region
    _
  $region13: #{tpu_custom_call.1} parent=0 // pred_fallthru
    _

</llo_original>
